<compile_context>
chip_gen: v7x
topology: tpu7x:2x2x1
jax: 0.10.0
libtpu: 0.0.40
codegen_flags: <defaults>
</compile_context>

<pallas_src>
import jax
import jax.numpy as jnp
from jax.experimental import pallas as pl
from jax.experimental.pallas import tpu as pltpu


EMB_DIM = 32        # hidden width of the Embedding / input width of the Linear
CLASS_CHUNK = 256   # class-block size used when num_classes is large


def _round_up(x, m):
    return ((x + m - 1) // m) * m


def _make_kernel(dim, n_class_chunks, class_chunk):
    """Build the fused CondPrior kernel for static (dim, class-chunking)."""

    def kernel(lab_ref, emb_ref, w_ref, b_ref, out_ref):
        # lab_ref: (1, TB) int32 labels (lane-major)
        # emb_ref: (NC_pad, 32) f32 embedding table (VMEM resident)
        # w_ref:   (32, 2*dim) f32 Linear weight (unsplit)
        # b_ref:   (1, 2*dim)  f32 Linear bias
        # out_ref: (TB, 2*dim) f32 = [ loc | softplus(pre) ]
        lab = lab_ref[...]                                   # (1, TB)
        tb = lab.shape[1]

        # Embedding lookup: one-hot with classes on the sublane axis and batch
        # on lanes, contracted with a trans-A matmul (MXU), no gather needed.
        h = None
        for c in range(n_class_chunks):                      # static unroll
            cls = jax.lax.broadcasted_iota(jnp.int32, (class_chunk, tb), 0)
            onehot = (cls + c * class_chunk == lab).astype(jnp.float32)
            if n_class_chunks == 1:
                emb_blk = emb_ref[...]
            else:
                emb_blk = emb_ref[pl.ds(c * class_chunk, class_chunk), :]
            part = jax.lax.dot_general(
                onehot, emb_blk, (((0,), (0,)), ((), ())),
                preferred_element_type=jnp.float32)          # (TB, 32)
            h = part if h is None else h + part

        # ReLU (matches nn.Sequential(Embedding, ReLU, Linear)).
        h = jnp.maximum(h, 0.0)

        # Single fused head matmul + single bias add: (TB, 32) @ (32, 2*dim).
        y = jnp.dot(h, w_ref[...],
                    preferred_element_type=jnp.float32) + b_ref[...]

        # Numerically stable softplus on the whole tile (EUP work is a free
        # slot here), then select loc / softplus halves with a lane mask so we
        # never slice along the lane axis in-kernel.
        sp = jnp.maximum(y, 0.0) + jnp.log1p(jnp.exp(-jnp.abs(y)))
        lane = jax.lax.broadcasted_iota(jnp.int32, y.shape, 1)
        out_ref[...] = jnp.where(lane < dim, y, sp)

    return kernel


def cond_prior_forward(labels, emb, w, b, *, dim,
                       vmem_budget_bytes=12 * 1024 * 1024):
    """Fused CondPrior forward.  labels: (B,) int; returns (loc, scale)."""
    B = int(labels.shape[0])
    num_classes, emb_dim = emb.shape
    assert emb_dim == EMB_DIM
    assert w.shape == (EMB_DIM, 2 * dim)
    assert b.shape == (2 * dim,)

    # --- class chunking for large vocabularies -------------------------------
    if num_classes <= CLASS_CHUNK:
        class_chunk, n_chunks, nc_pad = num_classes, 1, num_classes
    else:
        class_chunk = CLASS_CHUNK
        nc_pad = _round_up(num_classes, CLASS_CHUNK)
        n_chunks = nc_pad // CLASS_CHUNK
        if nc_pad != num_classes:
            emb = jnp.pad(emb, ((0, nc_pad - num_classes), (0, 0)))

    # --- dim-aware batch tile under a conservative VMEM working-set budget ---
    # (fits v5e's 16 MiB scoped default; well under v7x's 64 MiB physical, so
    #  no vmem_limit_bytes override is needed on any generation)
    fixed = 2 * (nc_pad * EMB_DIM + EMB_DIM * 2 * dim + 2 * dim) * 4
    per_row = 2 * (2 * dim) * 4 + 2 * 8 * 4   # dbl-buffered out + label rows
    cap = max(128, (vmem_budget_bytes - fixed) // per_row)
    cap = min(2048, max(128, (cap // 128) * 128))

    padded_min = _round_up(max(B, 1), 8)
    if padded_min <= 128:
        # Single grid step: label block spans the full lane extent, so no
        # multiple-of-128 constraint applies to the tile.
        tile_b, padded_b = padded_min, padded_min
    else:
        # Multi-step: tile must be a multiple of 128 (lane-major label block),
        # and we want >= 2 grid steps so v7x's two TensorCores both get work.
        half = _round_up(-(-padded_min // 2), 128)
        tile_b = max(128, min(cap, half))
        padded_b = _round_up(B, tile_b)

    lab_row = labels.astype(jnp.int32).reshape(1, B)
    if padded_b != B:
        # Padded rows use class 0; results are sliced off below.
        lab_row = jnp.pad(lab_row, ((0, 0), (0, padded_b - B)))

    b2d = b.reshape(1, 2 * dim)
    grid = (padded_b // tile_b,)

    flops = 2 * padded_b * (nc_pad * EMB_DIM + EMB_DIM * 2 * dim)
    bytes_accessed = (padded_b * 4                       # labels
                      + nc_pad * EMB_DIM * 4             # embedding table
                      + EMB_DIM * 2 * dim * 4            # linear weight
                      + 2 * dim * 4                      # linear bias
                      + padded_b * 2 * dim * 4)          # fused [loc|scale] out

    out = pl.pallas_call(
        _make_kernel(dim, n_chunks, class_chunk),
        out_shape=jax.ShapeDtypeStruct((padded_b, 2 * dim), jnp.float32),
        grid_spec=pltpu.PrefetchScalarGridSpec(
            num_scalar_prefetch=0,
            grid=grid,
            in_specs=[
                pl.BlockSpec((1, tile_b), lambda i: (0, i)),           # labels
                pl.BlockSpec((nc_pad, EMB_DIM), lambda i: (0, 0)),     # emb
                pl.BlockSpec((EMB_DIM, 2 * dim), lambda i: (0, 0)),    # weight
                pl.BlockSpec((1, 2 * dim), lambda i: (0, 0)),          # bias
            ],
            out_specs=pl.BlockSpec((tile_b, 2 * dim), lambda i: (i, 0)),
        ),
        compiler_params=pltpu.CompilerParams(
            dimension_semantics=("parallel",),
        ),
        cost_estimate=pl.CostEstimate(
            flops=int(flops),
            transcendentals=int(2 * padded_b * 2 * dim),
            bytes_accessed=int(bytes_accessed),
        ),
    )(lab_row, emb, w, b2d)

    loc = out[:B, :dim]
    scale = out[:B, dim:]
    return loc, scale


class CondPrior:
    """JAX/Pallas analogue of the PyTorch CondPrior module."""

    def __init__(self, dim, num_classes, key):
        self.dim = dim
        self.num_classes = num_classes
        k_emb, k_w, k_b = jax.random.split(key, 3)
        self.emb = jax.random.normal(k_emb, (num_classes, EMB_DIM),
                                     dtype=jnp.float32)
        self.w = jax.random.normal(k_w, (EMB_DIM, 2 * dim),
                                   dtype=jnp.float32) / jnp.sqrt(EMB_DIM)
        self.b = 0.1 * jax.random.normal(k_b, (2 * dim,), dtype=jnp.float32)

    def __call__(self, labels):
        return cond_prior_forward(labels, self.emb, self.w, self.b,
                                  dim=self.dim)


def _reference(labels, emb, w, b, dim):
    h = jnp.maximum(emb[labels], 0.0)                        # Embedding + ReLU
    y = jnp.dot(h, w, preferred_element_type=jnp.float32) + b
    loc, pre = y[:, :dim], y[:, dim:]
    return loc, jax.nn.softplus(pre)


if __name__ == "__main__":
    key = jax.random.PRNGKey(0)
    k_params, k_lab = jax.random.split(key)

    dim = 32
    num_classes = 10
    batch = 8

    mod = CondPrior(dim, num_classes, k_params)
    labels = jax.random.randint(k_lab, (batch,), 0, num_classes,
                                dtype=jnp.int32)

    loc, scale = mod(labels)
    loc = jax.block_until_ready(loc)
    scale = jax.block_until_ready(scale)

    ref_loc, ref_scale = _reference(labels, mod.emb, mod.w, mod.b, dim)

    assert loc.shape == (batch, dim) and scale.shape == (batch, dim)
    assert loc.dtype == jnp.float32 and scale.dtype == jnp.float32
    assert bool(jnp.allclose(loc, ref_loc, rtol=1e-3, atol=1e-3)), "loc mismatch"
    assert bool(jnp.allclose(scale, ref_scale, rtol=1e-3, atol=1e-3)), \
        "scale mismatch"
    assert bool(jnp.all(scale > 0.0)), "softplus output must be positive"

    print("KERNEL_OK")
</pallas_src>

<mosaic_0001>
module attributes {stable_mosaic.version = 11 : i64} {
  func.func @kernel(%arg0: i32, %arg1: memref<1x8xi32, #tpu.memory_space<vmem>>, %arg2: memref<10x32xf32, #tpu.memory_space<vmem>>, %arg3: memref<32x64xf32, #tpu.memory_space<vmem>>, %arg4: memref<1x64xf32, #tpu.memory_space<vmem>>, %arg5: memref<8x64xf32, #tpu.memory_space<vmem>>) attributes {dimension_semantics = [#tpu.dimension_semantics<parallel>], iteration_bounds = array<i64: 1>, scalar_prefetch = 0 : i64, scratch_operands = 0 : i64, tpu.core_type = #tpu.core_type<tc>, window_params = [{transform_indices = @transform_0, window_bounds = array<i64: 1, 8>}, {pipeline_mode = #tpu.pipeline_mode<synchronous>, transform_indices = @transform_1, window_bounds = array<i64: 10, 32>}, {pipeline_mode = #tpu.pipeline_mode<synchronous>, transform_indices = @transform_2, window_bounds = array<i64: 32, 64>}, {pipeline_mode = #tpu.pipeline_mode<synchronous>, transform_indices = @transform_3, window_bounds = array<i64: 1, 64>}, {transform_indices = @transform_4, window_bounds = array<i64: 8, 64>}]} {
    %c0 = arith.constant 0 : index
    %c0_0 = arith.constant 0 : index
    %0 = vector.load %arg1[%c0, %c0_0] : memref<1x8xi32, #tpu.memory_space<vmem>>, vector<1x8xi32>
    %1 = tpu.iota {dimensions = array<i32: 0>} : vector<10x8xi32>
    %c0_i32 = arith.constant 0 : i32
    %2 = vector.broadcast %c0_i32 : i32 to vector<10x8xi32>
    %3 = arith.addi %1, %2 : vector<10x8xi32>
    %4 = vector.broadcast %0 : vector<1x8xi32> to vector<10x8xi32>
    %5 = arith.cmpi eq, %3, %4 : vector<10x8xi32>
    %6 = arith.extui %5 : vector<10x8xi1> to vector<10x8xi32>
    %7 = arith.sitofp %6 : vector<10x8xi32> to vector<10x8xf32>
    %c0_1 = arith.constant 0 : index
    %c0_2 = arith.constant 0 : index
    %8 = vector.load %arg2[%c0_1, %c0_2] : memref<10x32xf32, #tpu.memory_space<vmem>>, vector<10x32xf32>
    %cst = arith.constant dense<0.000000e+00> : vector<8x32xf32>
    %9 = tpu.matmul %7, %8, %cst {dimension_numbers = #tpu.dot_dimension_numbers<[0], [0], [1], [1], [0, 1, 1, 1], [], []>} : vector<10x8xf32>, vector<10x32xf32>, vector<8x32xf32> -> vector<8x32xf32>
    %cst_3 = arith.constant 0.000000e+00 : f32
    %10 = vector.broadcast %cst_3 : f32 to vector<8x32xf32>
    %11 = arith.maximumf %9, %10 : vector<8x32xf32>
    %c0_4 = arith.constant 0 : index
    %c0_5 = arith.constant 0 : index
    %12 = vector.load %arg3[%c0_4, %c0_5] : memref<32x64xf32, #tpu.memory_space<vmem>>, vector<32x64xf32>
    %cst_6 = arith.constant dense<0.000000e+00> : vector<8x64xf32>
    %13 = tpu.matmul %11, %12, %cst_6 {dimension_numbers = #tpu.dot_dimension_numbers<[1], [0], [0], [1], [0, 0, 1, 1], [], []>} : vector<8x32xf32>, vector<32x64xf32>, vector<8x64xf32> -> vector<8x64xf32>
    %c0_7 = arith.constant 0 : index
    %c0_8 = arith.constant 0 : index
    %14 = vector.load %arg4[%c0_7, %c0_8] : memref<1x64xf32, #tpu.memory_space<vmem>>, vector<1x64xf32>
    %15 = vector.broadcast %14 : vector<1x64xf32> to vector<8x64xf32>
    %16 = arith.addf %13, %15 : vector<8x64xf32>
    %cst_9 = arith.constant 0.000000e+00 : f32
    %17 = vector.broadcast %cst_9 : f32 to vector<8x64xf32>
    %18 = arith.maximumf %16, %17 : vector<8x64xf32>
    %19 = math.absf %16 : vector<8x64xf32>
    %cst_10 = arith.constant 0.000000e+00 : f32
    %20 = vector.broadcast %cst_10 : f32 to vector<8x64xf32>
    %21 = arith.subf %20, %19 : vector<8x64xf32>
    %22 = math.exp %21 : vector<8x64xf32>
    %23 = math.log1p %22 : vector<8x64xf32>
    %24 = arith.addf %18, %23 : vector<8x64xf32>
    %25 = tpu.iota {dimensions = array<i32: 1>} : vector<8x64xi32>
    %c32_i32 = arith.constant 32 : i32
    %26 = vector.broadcast %c32_i32 : i32 to vector<8x64xi32>
    %27 = arith.cmpi slt, %25, %26 : vector<8x64xi32>
    %28 = arith.select %27, %16, %24 : vector<8x64xi1>, vector<8x64xf32>
    %c0_11 = arith.constant 0 : index
    %c0_12 = arith.constant 0 : index
    %29 = vector.load %arg5[%c0_11, %c0_12] : memref<8x64xf32, #tpu.memory_space<vmem>>, vector<8x64xf32>
    tpu.vector_store %arg5[%c0_11, %c0_12], %28 {strides = array<i32>} : memref<8x64xf32, #tpu.memory_space<vmem>>, vector<8x64xf32>,
    return
  }
  func.func @transform_0(%arg0: i32) -> (i32, i32) {
    %c0_i32 = arith.constant 0 : i32
    %c0_i32_0 = arith.constant 0 : i32
    return %c0_i32, %arg0 : i32, i32
  }
  func.func @transform_1(%arg0: i32) -> (i32, i32) {
    %c0_i32 = arith.constant 0 : i32
    %c0_i32_0 = arith.constant 0 : i32
    %c0_i32_1 = arith.constant 0 : i32
    return %c0_i32, %c0_i32_0 : i32, i32
  }
  func.func @transform_2(%arg0: i32) -> (i32, i32) {
    %c0_i32 = arith.constant 0 : i32
    %c0_i32_0 = arith.constant 0 : i32
    %c0_i32_1 = arith.constant 0 : i32
    return %c0_i32, %c0_i32_0 : i32, i32
  }
  func.func @transform_3(%arg0: i32) -> (i32, i32) {
    %c0_i32 = arith.constant 0 : i32
    %c0_i32_0 = arith.constant 0 : i32
    %c0_i32_1 = arith.constant 0 : i32
    return %c0_i32, %c0_i32_0 : i32, i32
  }
  func.func @transform_4(%arg0: i32) -> (i32, i32) {
    %c0_i32 = arith.constant 0 : i32
    %c0_i32_0 = arith.constant 0 : i32
    return %arg0, %c0_i32 : i32, i32
  }
}

</mosaic_0001>

<llo_original>
// kernel: tpu_custom_call.1
$region0: #{tpu_custom_call.1}
  #allocation0 [shape = 'u32[]', space=smem, size = 0x4, offset = 0x4, fixed_abs, tag = 'smem constant byte address 0x4 - core index']
  #allocation1 [shape = 'u32[144,128]{1,0:T(1,128)}', space=vmem, size = 0x12000, scoped, tag = 'internal scratch']
  %s0 = inlined_call_operand.hbm [shape: s32[1,8], index: 0, kind: input, shape index: {}]
  %s1 = inlined_call_operand.hbm [shape: f32[10,32], index: 1, kind: input, shape index: {}]
  %s2 = inlined_call_operand.hbm [shape: f32[32,64], index: 2, kind: input, shape index: {}]
  %s3 = inlined_call_operand.vmem [shape: f32[1,64], index: 3, kind: input, shape index: {}]
  %s4 = inlined_call_operand.hbm [shape: f32[8,64], index: 4, kind: output, shape index: {}]
  %s5 = sld [smem:[#allocation0]]
  $region38: #{tpu_custom_call.1} parent=0
    _
  %s7 = ssub.s32 1, %s5
  %s8 = scalar_select 0, %s7, %s5
  $region1: #{tpu_custom_call.1} parent=0
    #allocation2 [shape = 'u8[512]{0}', space=vmem, size = 0x400, scoped, tag = 'input window, operand 0, single buffered']
    #allocation3 [shape = 's32[1]{0}', space=sflag, size = 0x4, scoped, tag = 'scoped memory for tpu_custom_call.1']
    #allocation4 [shape = 's32[1]{0}', space=sflag, size = 0x4, scoped, tag = 'scoped memory for tpu_custom_call.1']
    #allocation5 [shape = 'u8[8192]{0}', space=vmem, size = 0x2000, scoped, tag = 'input window, operand 1, single buffered']
    #allocation6 [shape = 's32[1]{0}', space=sflag, size = 0x4, scoped, tag = 'scoped memory for tpu_custom_call.1']
    #allocation7 [shape = 'u8[16384]{0}', space=vmem, size = 0x4000, scoped, tag = 'input window, operand 2, single buffered']
    #allocation8 [shape = 'u8[4096]{0}', space=vmem, size = 0x1000, scoped, tag = 'output window, operand 0, single buffered']
    %9 = vsyncpa [#allocation3], 0
    %10 = vsyncpa [#allocation6], 0
    %11 = vsyncpa [#allocation4], 0
    // Predicated region
    $region2: #{tpu_custom_call.1} parent=1 // pred_check
      _
    $region3: #{tpu_custom_call.1} parent=1 // pred_check_branch
      %13 = sbr.rel (0) target = $region5
    $region4: #{tpu_custom_call.1} parent=1 // pred_region
      %s15 = ssub.s32 16, 16
      %16 = vsyncadd [#allocation3], %s15
      %s18 = sshll.u32 [#allocation2], 4
      %s19 = int_to_ptr.vmem [resolvable:$true] %s18
      %21 = dma.hbm_to_vmem [thread:$0]  %s0, 16, %s19, [#allocation3]
    $region5: #{tpu_custom_call.1} parent=1 // pred_fallthru
      _
    // Predicated region
    $region6: #{tpu_custom_call.1} parent=1 // pred_check
      _
    $region7: #{tpu_custom_call.1} parent=1 // pred_check_branch
      %23 = sbr.rel (0) target = $region9
    $region8: #{tpu_custom_call.1} parent=1 // pred_region
      %s25 = ssub.s32 256, 256
      %26 = vsyncadd [#allocation6], %s25
      %s27 = sshll.u32 [#allocation5], 4
      %s28 = int_to_ptr.vmem [resolvable:$true] %s27
      %33 = dma.hbm_to_vmem [thread:$0]  %s1, 256, %s28, [#allocation6], 128, 128, 8
    $region9: #{tpu_custom_call.1} parent=1 // pred_fallthru
      _
    // Predicated region
    $region10: #{tpu_custom_call.1} parent=1 // pred_check
      _
    $region11: #{tpu_custom_call.1} parent=1 // pred_check_branch
      %35 = sbr.rel (0) target = $region13
    $region12: #{tpu_custom_call.1} parent=1 // pred_region
      %s37 = ssub.s32 512, 512
      %38 = vsyncadd [#allocation6], %s37
      %s39 = sshll.u32 [#allocation7], 4
      %s40 = int_to_ptr.vmem [resolvable:$true] %s39
      %45 = dma.hbm_to_vmem [thread:$0]  %s2, 512, %s40, [#allocation6], 128, 128, 8
    $region13: #{tpu_custom_call.1} parent=1 // pred_fallthru
      _
    // Predicated region
    $region14: #{tpu_custom_call.1} parent=1 // pred_check
      _
    $region15: #{tpu_custom_call.1} parent=1 // pred_check_branch
      %47 = sbr.rel (0) target = $region17
    $region16: #{tpu_custom_call.1} parent=1 // pred_region
      _
    $region17: #{tpu_custom_call.1} parent=1 // pred_fallthru
      _
    // Predicated region
    $region18: #{tpu_custom_call.1} parent=1 // pred_check
      _
    $region19: #{tpu_custom_call.1} parent=1 // pred_check_branch
      %49 = sbr.rel (0) target = $region21
    $region20: #{tpu_custom_call.1} parent=1 // pred_region
      %50 = dma.done [#allocation3], 16
    $region21: #{tpu_custom_call.1} parent=1 // pred_fallthru
      _
    // Predicated region
    $region22: #{tpu_custom_call.1} parent=1 // pred_check
      _
    $region23: #{tpu_custom_call.1} parent=1 // pred_check_branch
      %52 = sbr.rel (0) target = $region25
    $region24: #{tpu_custom_call.1} parent=1 // pred_region
      %53 = dma.done [#allocation6], 256
    $region25: #{tpu_custom_call.1} parent=1 // pred_fallthru
      _
    // Predicated region
    $region26: #{tpu_custom_call.1} parent=1 // pred_check
      _
    $region27: #{tpu_custom_call.1} parent=1 // pred_check_branch
      %55 = sbr.rel (0) target = $region29
    $region28: #{tpu_custom_call.1} parent=1 // pred_region
      %56 = dma.done [#allocation6], 512
    $region29: #{tpu_custom_call.1} parent=1 // pred_fallthru
      _
    %v57 = vld [vmem:[#allocation2] sm:$0x1]
    %v58 = vlaneseq
    %v59 = vshrl.u32 %v58, 7
    %v60 = vadd.s32 %v59, 8
    %v61 = vlaneseq
    %v62 = vshrl.u32 %v61, 7
    %v63 = vsub.s32 0, %v62
    %v64 = vrot.slane %v57, %v63
    %vm65 = vcmp.eq.s32.totalorder %v59, %v64
    %vm66 = vcmp.eq.s32.totalorder %v60, %v64
    %v67 = vsel %vm65, 1, 0
    %v68 = vsel %vm66, 1, 0
    %v69 = vcvt.s32.f32 %v67
    %v70 = vcvt.s32.f32 %v68
    %v71 = vld [vmem:[#allocation5] sm:$0xff]
    %v72 = vld [vmem:[#allocation5 + $0x8] sm:$0x3]
    %73 = vxpose.xlu0.b32.start [1/16] %v69, 128
    %74 = vxpose.xlu0.b32.cont [2/16] %v70, 128
    %75 = vxpose.xlu0.b32.cont [3/16] 0.0, 128
    %76 = vxpose.xlu0.b32.cont [4/16] 0.0, 128
    %77 = vxpose.xlu0.b32.cont [5/16] 0.0, 128
    %78 = vxpose.xlu0.b32.cont [6/16] 0.0, 128
    %79 = vxpose.xlu0.b32.cont [7/16] 0.0, 128
    %80 = vxpose.xlu0.b32.cont [8/16] 0.0, 128
    %81 = vxpose.xlu0.b32.cont [9/16] 0.0, 128
    %82 = vxpose.xlu0.b32.cont [10/16] 0.0, 128
    %83 = vxpose.xlu0.b32.cont [11/16] 0.0, 128
    %84 = vxpose.xlu0.b32.cont [12/16] 0.0, 128
    %85 = vxpose.xlu0.b32.cont [13/16] 0.0, 128
    %86 = vxpose.xlu0.b32.cont [14/16] 0.0, 128
    %87 = vxpose.xlu0.b32.cont [15/16] 0.0, 128
    %88 = vxpose.xlu0.b32.end [16/16] 0.0, 128
    %v89 = vpop.trf.xlu0
    %v90 = vpop.trf.xlu0
    %v91 = vpop.trf.xlu0
    %v92 = vpop.trf.xlu0
    %v93 = vpop.trf.xlu0
    %v94 = vpop.trf.xlu0
    %v95 = vpop.trf.xlu0
    %v96 = vpop.trf.xlu0
    %v97 = vpop.trf.xlu0
    %v98 = vpop.trf.xlu0
    %v99 = vpop.trf.xlu0
    %v100 = vpop.trf.xlu0
    %v101 = vpop.trf.xlu0
    %v102 = vpop.trf.xlu0
    %v103 = vpop.trf.xlu0
    %v104 = vpop.trf.xlu0
    %vm105 = vcmask 80896
    %v107 = vsel %vm105, %v89, 0
    %vm109 = vcmask 1041408
    %v111 = vsel %vm109, %v72, 0
    %113 = vmatprep.subr.mxu0 0.0
    %114 = vmatpush1.msra.mxu0 %v71
    %115 = vmatprep.subr.mxu0 0.0
    %116 = vmatpush1.msra.mxu0 %v111
    %117 = vmatprep.subr.mxu0 0.0
    %118 = vmatpush1.msra.mxu0 0.0
    %119 = vmatprep.subr.mxu0 0.0
    %120 = vmatpush1.msra.mxu0 0.0
    %121 = vmatprep.subr.mxu0 0.0
    %122 = vmatpush1.msra.mxu0 0.0
    %123 = vmatprep.subr.mxu0 0.0
    %124 = vmatpush1.msra.mxu0 0.0
    %125 = vmatprep.subr.mxu0 0.0
    %126 = vmatpush1.msra.mxu0 0.0
    %127 = vmatprep.subr.mxu0 0.0
    %128 = vmatpush1.msra.mxu0 0.0
    %129 = vmatprep.subr.mxu0 0.0
    %130 = vmatpush1.msra.mxu0 0.0
    %131 = vmatprep.subr.mxu0 0.0
    %132 = vmatpush1.msra.mxu0 0.0
    %133 = vmatprep.subr.mxu0 0.0
    %134 = vmatpush1.msra.mxu0 0.0
    %135 = vmatprep.subr.mxu0 0.0
    %136 = vmatpush1.msra.mxu0 0.0
    %137 = vmatprep.subr.mxu0 0.0
    %138 = vmatpush1.msra.mxu0 0.0
    %139 = vmatprep.subr.mxu0 0.0
    %140 = vmatpush1.msra.mxu0 0.0
    %141 = vmatprep.subr.mxu0 0.0
    %142 = vmatpush1.msra.mxu0 0.0
    %143 = vmatprep.subr.mxu0 0.0
    %144 = vmatpush1.msra.mxu0 0.0
    %145 = vmatprep.subr.mxu0 0.0
    %146 = vmatpush1.msra.mxu0 0.0
    %147 = vmatprep.subr.mxu0 0.0
    %148 = vmatpush1.msra.mxu0 0.0
    %149 = vmatprep.subr.mxu0 0.0
    %150 = vmatpush1.msra.mxu0 0.0
    %151 = vmatprep.subr.mxu0 0.0
    %152 = vmatpush1.msra.mxu0 0.0
    %153 = vmatprep.subr.mxu0 0.0
    %154 = vmatpush1.msra.mxu0 0.0
    %155 = vmatprep.subr.mxu0 0.0
    %156 = vmatpush1.msra.mxu0 0.0
    %157 = vmatprep.subr.mxu0 0.0
    %158 = vmatpush1.msra.mxu0 0.0
    %159 = vmatprep.subr.mxu0 0.0
    %160 = vmatpush1.msra.mxu0 0.0
    %161 = vmatprep.subr.mxu0 0.0
    %162 = vmatpush1.msra.mxu0 0.0
    %163 = vmatprep.subr.mxu0 0.0
    %164 = vmatpush1.msra.mxu0 0.0
    %165 = vmatprep.subr.mxu0 0.0
    %166 = vmatpush1.msra.mxu0 0.0
    %167 = vmatprep.subr.mxu0 0.0
    %168 = vmatpush1.msra.mxu0 0.0
    %169 = vmatprep.subr.mxu0 0.0
    %170 = vmatpush1.msra.mxu0 0.0
    %171 = vmatprep.subr.mxu0 0.0
    %172 = vmatpush1.msra.mxu0 0.0
    %173 = vmatprep.subr.mxu0 0.0
    %174 = vmatpush1.msra.mxu0 0.0
    %175 = vmatprep.subr.mxu0 0.0
    %176 = vmatpush1.msra.mxu0 0.0
    %177 = vmatprep.mubr.f32.mxu0 0.0
    %178 = vmatmul.mubr.f32.gmra.mrb[0].mxu0 %v107
    %v179 = vpop.f32.mrb[0].mxu0
    %v180 = vadd.f32 0.0, %v179
    %v181 = vpop.f32.mrb[0].mxu0
    %182 = vdwg.mxu0
    %v183 = vmax.f32 %v180, 0.0
    %v184 = vld [vmem:[#allocation7] sm:$0xff]
    %v185 = vld [vmem:[#allocation7 + $0x8] sm:$0xff]
    %v186 = vld [vmem:[#allocation7 + $0x10] sm:$0xff]
    %v187 = vld [vmem:[#allocation7 + $0x18] sm:$0xff]
    %v188 = vld [vmem:[%s3] sm:$0x1]
    %v190 = vlaneseq
    %v191 = vshrl.u32 %v190, 7
    %v192 = vsub.s32 0, %v191
    %v193 = vrot.slane %v188, %v192
    %vm195 = vcmask 261120
    %v197 = vsel %vm195, %v183, 0
    %199 = vmatprep.subr.mxu0 0.0
    %200 = vmatpush1.msra.mxu0 %v184
    %201 = vmatprep.subr.mxu0 0.0
    %202 = vmatpush1.msra.mxu0 %v185
    %203 = vmatprep.subr.mxu0 0.0
    %204 = vmatpush1.msra.mxu0 %v186
    %205 = vmatprep.subr.mxu0 0.0
    %206 = vmatpush1.msra.mxu0 %v187
    %207 = vmatprep.subr.mxu0 0.0
    %208 = vmatpush1.msra.mxu0 0.0
    %209 = vmatprep.subr.mxu0 0.0
    %210 = vmatpush1.msra.mxu0 0.0
    %211 = vmatprep.subr.mxu0 0.0
    %212 = vmatpush1.msra.mxu0 0.0
    %213 = vmatprep.subr.mxu0 0.0
    %214 = vmatpush1.msra.mxu0 0.0
    %215 = vmatprep.subr.mxu0 0.0
    %216 = vmatpush1.msra.mxu0 0.0
    %217 = vmatprep.subr.mxu0 0.0
    %218 = vmatpush1.msra.mxu0 0.0
    %219 = vmatprep.subr.mxu0 0.0
    %220 = vmatpush1.msra.mxu0 0.0
    %221 = vmatprep.subr.mxu0 0.0
    %222 = vmatpush1.msra.mxu0 0.0
    %223 = vmatprep.subr.mxu0 0.0
    %224 = vmatpush1.msra.mxu0 0.0
    %225 = vmatprep.subr.mxu0 0.0
    %226 = vmatpush1.msra.mxu0 0.0
    %227 = vmatprep.subr.mxu0 0.0
    %228 = vmatpush1.msra.mxu0 0.0
    %229 = vmatprep.subr.mxu0 0.0
    %230 = vmatpush1.msra.mxu0 0.0
    %231 = vmatprep.subr.mxu0 0.0
    %232 = vmatpush1.msra.mxu0 0.0
    %233 = vmatprep.subr.mxu0 0.0
    %234 = vmatpush1.msra.mxu0 0.0
    %235 = vmatprep.subr.mxu0 0.0
    %236 = vmatpush1.msra.mxu0 0.0
    %237 = vmatprep.subr.mxu0 0.0
    %238 = vmatpush1.msra.mxu0 0.0
    %239 = vmatprep.subr.mxu0 0.0
    %240 = vmatpush1.msra.mxu0 0.0
    %241 = vmatprep.subr.mxu0 0.0
    %242 = vmatpush1.msra.mxu0 0.0
    %243 = vmatprep.subr.mxu0 0.0
    %244 = vmatpush1.msra.mxu0 0.0
    %245 = vmatprep.subr.mxu0 0.0
    %246 = vmatpush1.msra.mxu0 0.0
    %247 = vmatprep.subr.mxu0 0.0
    %248 = vmatpush1.msra.mxu0 0.0
    %249 = vmatprep.subr.mxu0 0.0
    %250 = vmatpush1.msra.mxu0 0.0
    %251 = vmatprep.subr.mxu0 0.0
    %252 = vmatpush1.msra.mxu0 0.0
    %253 = vmatprep.subr.mxu0 0.0
    %254 = vmatpush1.msra.mxu0 0.0
    %255 = vmatprep.subr.mxu0 0.0
    %256 = vmatpush1.msra.mxu0 0.0
    %257 = vmatprep.subr.mxu0 0.0
    %258 = vmatpush1.msra.mxu0 0.0
    %259 = vmatprep.subr.mxu0 0.0
    %260 = vmatpush1.msra.mxu0 0.0
    %261 = vmatprep.subr.mxu0 0.0
    %262 = vmatpush1.msra.mxu0 0.0
    %263 = vmatprep.mubr.f32.mxu0 0.0
    %264 = vmatmul.mubr.f32.gmra.mrb[0].mxu0 %v197
    %v265 = vpop.f32.mrb[0].mxu0
    %v266 = vadd.f32 %v193, %v265
    %v267 = vpop.f32.mrb[0].mxu0
    %268 = vdwg.mxu0
    %v269 = vmax.f32 %v266, 0.0
    %v270 = vand.u32 2147483647, %v266
    %v271 = vsub.f32 0.0, %v270
    %v272 = vmul.f32 %v271, 1.442695
    %v273 = vpow.pop %v272
    %v274 = vadd.f32 %v273, 1.0
    %v275 = vlog2.pop %v274
    %v276 = vmul.f32 %v275, 0.6931472
    %v277 = vmul.f32 -0.5, %v273
    %v278 = vadd.f32 %v277, 1.0
    %v279 = vmul.f32 %v278, %v273
    %v280 = vand.u32 2147483647, %v273
    %vm281 = vcmp.lt.f32.partialorder %v280, 0.0004427343
    %v282 = vsel %vm281, %v279, %v276
    %v283 = vadd.f32 %v269, %v282
    %v284 = vlaneseq
    %v285 = vand.u32 %v284, 127
    %vm286 = vcmp.lt.s32.totalorder %v285, 32
    %v287 = vsel %vm286, %v266, %v283
    %vm288 = vcmask 523264
    %289 = vst.msk [vmem:[#allocation8] sm:$0xff] %vm288, %v287
    // Predicated region
    $region30: #{tpu_custom_call.1} parent=1 // pred_check
      _
    $region31: #{tpu_custom_call.1} parent=1 // pred_check_branch
      %291 = sbr.rel (0) target = $region33
    $region32: #{tpu_custom_call.1} parent=1 // pred_region
      %s293 = ssub.s32 128, 128
      %294 = vsyncadd [#allocation4], %s293
      %s296 = sshll.u32 [#allocation8], 4
      %s297 = int_to_ptr.vmem [resolvable:$true] %s296
      %299 = dma.vmem_to_hbm [thread:$0]  %s297, 128, %s4, [#allocation4]
    $region33: #{tpu_custom_call.1} parent=1 // pred_fallthru
      _
    // Predicated region
    $region34: #{tpu_custom_call.1} parent=1 // pred_check
      _
    $region35: #{tpu_custom_call.1} parent=1 // pred_check_branch
      %301 = sbr.rel (0) target = $region37
    $region36: #{tpu_custom_call.1} parent=1 // pred_region
      %302 = dma.done [#allocation4], 128
    $region37: #{tpu_custom_call.1} parent=1 // pred_fallthru
      _
    %303 = vsyncpa [#allocation3], 1
    %304 = vsyncpa [#allocation6], 1
    %305 = vsyncpa [#allocation4], 1

</llo_original>
